<compile_context>
chip_gen: v7x
topology: tpu7x:2x2x1
jax: 0.10.0
libtpu: 0.0.40
codegen_flags: <defaults>
</compile_context>

<pallas_src>
import functools

import jax
import jax.numpy as jnp
from jax.experimental import pallas as pl
from jax.experimental.pallas import tpu as pltpu


def _round_up(x, m):
    return ((x + m - 1) // m) * m


def _cond_mlp_kernel(x_ref, w1_ref, b1_ref, w2_ref, b2_ref, o_ref):
    # Two MXU matmuls in bf16 with f32 accumulation; bias + SiLU in f32.
    x = x_ref[...].astype(jnp.bfloat16)                               # (TB, Din)
    h = jnp.dot(x, w1_ref[...], preferred_element_type=jnp.float32)   # (TB, H) f32
    h = h + b1_ref[...]
    h = h * jax.nn.sigmoid(h)                                         # SiLU (f32, EUP)
    y = jnp.dot(h.astype(jnp.bfloat16), w2_ref[...],
                preferred_element_type=jnp.float32)                   # (TB, Dout) f32
    y = y + b2_ref[...]
    o_ref[...] = y.astype(o_ref.dtype)


def prepare_params(w1, b1, w2, b2):
    """One-time parameter prep, hoisted out of the per-call path.

    Weights stored as (fan_in, fan_out) so the kernel computes y = x @ W + b.
    Returns bf16 weights (MXU-native, halves weight DMA) and f32 (1, dim) biases.
    """
    return (jnp.asarray(w1, jnp.bfloat16),
            jnp.asarray(b1, jnp.float32).reshape(1, -1),
            jnp.asarray(w2, jnp.bfloat16),
            jnp.asarray(b2, jnp.float32).reshape(1, -1))


@functools.partial(jax.jit, static_argnames=("block_b",))
def cond_mlp_forward(cond, w1, b1, w2, b2, *, block_b=2048):
    """cond: (B, input_dim) -> (B, output_dim, 1, 1).

    w1/b1/w2/b2 must come from `prepare_params` (bf16 weights, f32 row biases).
    """
    B, d_in = cond.shape
    hidden = w1.shape[1]
    d_out = w2.shape[1]

    # Batch tile: multiple of 8 sublanes, capped at block_b; ragged last tile
    # is handled by Pallas (partial store masked), no padding copies.
    tb = min(block_b, _round_up(B, 8))
    grid = (pl.cdiv(B, tb),)

    out_itemsize = jnp.dtype(cond.dtype).itemsize
    cost = pl.CostEstimate(
        flops=2 * B * (d_in * hidden + hidden * d_out),
        transcendentals=B * hidden,  # sigmoid exp
        bytes_accessed=(B * d_in * out_itemsize        # x
                        + d_in * hidden * 2            # w1 (bf16)
                        + hidden * d_out * 2           # w2 (bf16)
                        + (hidden + d_out) * 4         # biases (f32)
                        + B * d_out * out_itemsize))   # out

    out2d = pl.pallas_call(
        _cond_mlp_kernel,
        out_shape=jax.ShapeDtypeStruct((B, d_out), cond.dtype),
        grid=grid,
        in_specs=[
            # Activations: tiled over batch; feature dims are full array dims,
            # so no (8,128) padding is required.
            pl.BlockSpec((tb, d_in), lambda i: (i, 0)),
            # Weights / biases: constant index_map -> VMEM-resident, DMA'd once.
            pl.BlockSpec((d_in, hidden), lambda i: (0, 0)),
            pl.BlockSpec((1, hidden), lambda i: (0, 0)),
            pl.BlockSpec((hidden, d_out), lambda i: (0, 0)),
            pl.BlockSpec((1, d_out), lambda i: (0, 0)),
        ],
        out_specs=pl.BlockSpec((tb, d_out), lambda i: (i, 0)),
        compiler_params=pltpu.CompilerParams(
            dimension_semantics=("parallel",)),
        cost_estimate=cost,
    )(cond, w1, b1, w2, b2)

    # unsqueeze(-1).unsqueeze(-1)  (free row-major reshape, no copy)
    return out2d.reshape(B, d_out, 1, 1)


def init_params(key, input_dim=192, hidden_dim=256, output_dim=192,
                dtype=jnp.float32):
    """Deterministic init mirroring torch.nn.Linear defaults (U[-1/sqrt(fan_in), ...])."""
    k1, k2, k3, k4 = jax.random.split(key, 4)
    bound1 = 1.0 / (input_dim ** 0.5)
    bound2 = 1.0 / (hidden_dim ** 0.5)
    # Stored pre-transposed: y = x @ W + b, W has shape (fan_in, fan_out).
    w1 = jax.random.uniform(k1, (input_dim, hidden_dim), dtype,
                            minval=-bound1, maxval=bound1)
    b1 = jax.random.uniform(k2, (1, hidden_dim), dtype,
                            minval=-bound1, maxval=bound1)
    w2 = jax.random.uniform(k3, (hidden_dim, output_dim), dtype,
                            minval=-bound2, maxval=bound2)
    b2 = jax.random.uniform(k4, (1, output_dim), dtype,
                            minval=-bound2, maxval=bound2)
    return w1, b1, w2, b2


if __name__ == "__main__":
    input_dim, hidden_dim, output_dim = 192, 256, 192
    batch = 8

    key = jax.random.PRNGKey(0)
    k_x, k_p = jax.random.split(key)
    cond = jax.random.normal(k_x, (batch, input_dim), dtype=jnp.float32)
    w1, b1, w2, b2 = init_params(k_p, input_dim, hidden_dim, output_dim)

    # One-time prep (would be done at model load time in real use).
    w1_k, b1_k, w2_k, b2_k = prepare_params(w1, b1, w2, b2)

    out = cond_mlp_forward(cond, w1_k, b1_k, w2_k, b2_k)
    out = jax.block_until_ready(out)

    # Sanity check vs pure-JAX f32 reference (loose tolerance: kernel uses
    # bf16 MXU operands with f32 accumulation — documented precision contract).
    h_ref = cond @ w1 + b1
    h_ref = h_ref * jax.nn.sigmoid(h_ref)
    y_ref = (h_ref @ w2 + b2).reshape(batch, output_dim, 1, 1)
    assert out.shape == (batch, output_dim, 1, 1)
    assert jnp.allclose(out, y_ref, atol=5e-2, rtol=5e-2), (
        float(jnp.max(jnp.abs(out - y_ref))))

    print("KERNEL_OK")
</pallas_src>

<mosaic_0001>
module attributes {stable_mosaic.version = 11 : i64} {
  func.func @_cond_mlp_kernel(%arg0: i32, %arg1: memref<8x192xf32, #tpu.memory_space<vmem>>, %arg2: memref<192x256xbf16, #tpu.memory_space<vmem>>, %arg3: memref<1x256xf32, #tpu.memory_space<vmem>>, %arg4: memref<256x192xbf16, #tpu.memory_space<vmem>>, %arg5: memref<1x192xf32, #tpu.memory_space<vmem>>, %arg6: memref<8x192xf32, #tpu.memory_space<vmem>>) attributes {dimension_semantics = [#tpu.dimension_semantics<parallel>], iteration_bounds = array<i64: 1>, scalar_prefetch = 0 : i64, scratch_operands = 0 : i64, tpu.core_type = #tpu.core_type<tc>, window_params = [{transform_indices = @transform_0, window_bounds = array<i64: 8, 192>}, {pipeline_mode = #tpu.pipeline_mode<synchronous>, transform_indices = @transform_1, window_bounds = array<i64: 192, 256>}, {pipeline_mode = #tpu.pipeline_mode<synchronous>, transform_indices = @transform_2, window_bounds = array<i64: 1, 256>}, {pipeline_mode = #tpu.pipeline_mode<synchronous>, transform_indices = @transform_3, window_bounds = array<i64: 256, 192>}, {pipeline_mode = #tpu.pipeline_mode<synchronous>, transform_indices = @transform_4, window_bounds = array<i64: 1, 192>}, {transform_indices = @transform_5, window_bounds = array<i64: 8, 192>}]} {
    %c0 = arith.constant 0 : index
    %c0_0 = arith.constant 0 : index
    %0 = vector.load %arg1[%c0, %c0_0] : memref<8x192xf32, #tpu.memory_space<vmem>>, vector<8x192xf32>
    %1 = arith.truncf %0 : vector<8x192xf32> to vector<8x192xbf16>
    %c0_1 = arith.constant 0 : index
    %c0_2 = arith.constant 0 : index
    %2 = vector.load %arg2[%c0_1, %c0_2] : memref<192x256xbf16, #tpu.memory_space<vmem>>, vector<192x256xbf16>
    %cst = arith.constant dense<0.000000e+00> : vector<8x256xf32>
    %3 = tpu.matmul %1, %2, %cst {dimension_numbers = #tpu.dot_dimension_numbers<[1], [0], [0], [1], [0, 0, 1, 1], [], []>} : vector<8x192xbf16>, vector<192x256xbf16>, vector<8x256xf32> -> vector<8x256xf32>
    %c0_3 = arith.constant 0 : index
    %c0_4 = arith.constant 0 : index
    %4 = vector.load %arg3[%c0_3, %c0_4] : memref<1x256xf32, #tpu.memory_space<vmem>>, vector<1x256xf32>
    %5 = vector.broadcast %4 : vector<1x256xf32> to vector<8x256xf32>
    %6 = arith.addf %3, %5 : vector<8x256xf32>
    %7 = arith.negf %6 : vector<8x256xf32>
    %8 = math.exp %7 : vector<8x256xf32>
    %cst_5 = arith.constant 1.000000e+00 : f32
    %9 = vector.broadcast %cst_5 : f32 to vector<8x256xf32>
    %10 = arith.addf %9, %8 : vector<8x256xf32>
    %11 = arith.divf %9, %10 : vector<8x256xf32>
    %12 = arith.mulf %6, %11 : vector<8x256xf32>
    %13 = arith.truncf %12 : vector<8x256xf32> to vector<8x256xbf16>
    %c0_6 = arith.constant 0 : index
    %c0_7 = arith.constant 0 : index
    %14 = vector.load %arg4[%c0_6, %c0_7] : memref<256x192xbf16, #tpu.memory_space<vmem>>, vector<256x192xbf16>
    %cst_8 = arith.constant dense<0.000000e+00> : vector<8x192xf32>
    %15 = tpu.matmul %13, %14, %cst_8 {dimension_numbers = #tpu.dot_dimension_numbers<[1], [0], [0], [1], [0, 0, 1, 1], [], []>} : vector<8x256xbf16>, vector<256x192xbf16>, vector<8x192xf32> -> vector<8x192xf32>
    %c0_9 = arith.constant 0 : index
    %c0_10 = arith.constant 0 : index
    %16 = vector.load %arg5[%c0_9, %c0_10] : memref<1x192xf32, #tpu.memory_space<vmem>>, vector<1x192xf32>
    %17 = vector.broadcast %16 : vector<1x192xf32> to vector<8x192xf32>
    %18 = arith.addf %15, %17 : vector<8x192xf32>
    %c0_11 = arith.constant 0 : index
    %c0_12 = arith.constant 0 : index
    %19 = vector.load %arg6[%c0_11, %c0_12] : memref<8x192xf32, #tpu.memory_space<vmem>>, vector<8x192xf32>
    tpu.vector_store %arg6[%c0_11, %c0_12], %18 {strides = array<i32>} : memref<8x192xf32, #tpu.memory_space<vmem>>, vector<8x192xf32>,
    return
  }
  func.func @transform_0(%arg0: i32) -> (i32, i32) {
    %c0_i32 = arith.constant 0 : i32
    %c0_i32_0 = arith.constant 0 : i32
    return %arg0, %c0_i32 : i32, i32
  }
  func.func @transform_1(%arg0: i32) -> (i32, i32) {
    %c0_i32 = arith.constant 0 : i32
    %c0_i32_0 = arith.constant 0 : i32
    %c0_i32_1 = arith.constant 0 : i32
    return %c0_i32, %c0_i32_0 : i32, i32
  }
  func.func @transform_2(%arg0: i32) -> (i32, i32) {
    %c0_i32 = arith.constant 0 : i32
    %c0_i32_0 = arith.constant 0 : i32
    %c0_i32_1 = arith.constant 0 : i32
    return %c0_i32, %c0_i32_0 : i32, i32
  }
  func.func @transform_3(%arg0: i32) -> (i32, i32) {
    %c0_i32 = arith.constant 0 : i32
    %c0_i32_0 = arith.constant 0 : i32
    %c0_i32_1 = arith.constant 0 : i32
    return %c0_i32, %c0_i32_0 : i32, i32
  }
  func.func @transform_4(%arg0: i32) -> (i32, i32) {
    %c0_i32 = arith.constant 0 : i32
    %c0_i32_0 = arith.constant 0 : i32
    %c0_i32_1 = arith.constant 0 : i32
    return %c0_i32, %c0_i32_0 : i32, i32
  }
  func.func @transform_5(%arg0: i32) -> (i32, i32) {
    %c0_i32 = arith.constant 0 : i32
    %c0_i32_0 = arith.constant 0 : i32
    return %arg0, %c0_i32 : i32, i32
  }
}

</mosaic_0001>

<llo_original>
// kernel: cond_mlp_forward.1
$region0: #{cond_mlp_forward.1}
  #allocation0 [shape = 'u32[]', space=smem, size = 0x4, offset = 0x4, fixed_abs, tag = 'smem constant byte address 0x4 - core index']
  #allocation1 [shape = 'u32[144,128]{1,0:T(1,128)}', space=vmem, size = 0x12000, scoped, tag = 'internal scratch']
  %s0 = inlined_call_operand.vmem [shape: f32[8,192], index: 0, kind: input, shape index: {}]
  %s1 = inlined_call_operand.vmem [shape: bf16[192,256], index: 1, kind: input, shape index: {}]
  %s2 = inlined_call_operand.vmem [shape: f32[1,256], index: 2, kind: input, shape index: {}]
  %s3 = inlined_call_operand.vmem [shape: bf16[256,192], index: 3, kind: input, shape index: {}]
  %s4 = inlined_call_operand.vmem [shape: f32[1,192], index: 4, kind: input, shape index: {}]
  %s5 = inlined_call_operand.vmem [shape: f32[8,192], index: 5, kind: output, shape index: {}]
  %s6 = sld [smem:[#allocation0]]
  $region30: #{cond_mlp_forward.1} parent=0
    _
  %s8 = ssub.s32 1, %s6
  %s9 = scalar_select 0, %s8, %s6
  // Predicated region
  $region2: #{cond_mlp_forward.1} parent=0 // pred_check
    _
  $region3: #{cond_mlp_forward.1} parent=0 // pred_check_branch
    %11 = sbr.rel (0) target = $region5
  $region4: #{cond_mlp_forward.1} parent=0 // pred_region
    _
  $region5: #{cond_mlp_forward.1} parent=0 // pred_fallthru
    _
  // Predicated region
  $region6: #{cond_mlp_forward.1} parent=0 // pred_check
    _
  $region7: #{cond_mlp_forward.1} parent=0 // pred_check_branch
    %13 = sbr.rel (0) target = $region9
  $region8: #{cond_mlp_forward.1} parent=0 // pred_region
    _
  $region9: #{cond_mlp_forward.1} parent=0 // pred_fallthru
    _
  // Predicated region
  $region10: #{cond_mlp_forward.1} parent=0 // pred_check
    _
  $region11: #{cond_mlp_forward.1} parent=0 // pred_check_branch
    %15 = sbr.rel (0) target = $region13
  $region12: #{cond_mlp_forward.1} parent=0 // pred_region
    _
  $region13: #{cond_mlp_forward.1} parent=0 // pred_fallthru
    _
  // Predicated region
  $region14: #{cond_mlp_forward.1} parent=0 // pred_check
    _
  $region15: #{cond_mlp_forward.1} parent=0 // pred_check_branch
    %17 = sbr.rel (0) target = $region17
  $region16: #{cond_mlp_forward.1} parent=0 // pred_region
    _
  $region17: #{cond_mlp_forward.1} parent=0 // pred_fallthru
    _
  // Predicated region
  $region18: #{cond_mlp_forward.1} parent=0 // pred_check
    _
  $region19: #{cond_mlp_forward.1} parent=0 // pred_check_branch
    %19 = sbr.rel (0) target = $region21
  $region20: #{cond_mlp_forward.1} parent=0 // pred_region
    _
  $region21: #{cond_mlp_forward.1} parent=0 // pred_fallthru
    _
  %v21 = vld [vmem:[%s0] sm:$0xff]
  %v22 = vld [vmem:[%s0 + $0x8] sm:$0xff]
  %v23 = vpack.c.bf16 %v21, %v21
  %v24 = vpack.c.bf16 %v22, %v22
  %v25 = vld [vmem:[%s1] sm:$0xff]
  %v26 = vld [vmem:[%s1 + $0x8] sm:$0xff]
  %v27 = vld [vmem:[%s1 + $0x10] sm:$0xff]
  %v28 = vld [vmem:[%s1 + $0x18] sm:$0xff]
  %v29 = vld [vmem:[%s1 + $0x20] sm:$0xff]
  %v30 = vld [vmem:[%s1 + $0x28] sm:$0xff]
  %v31 = vld [vmem:[%s1 + $0x30] sm:$0xff]
  %v32 = vld [vmem:[%s1 + $0x38] sm:$0xff]
  %v33 = vld [vmem:[%s1 + $0x40] sm:$0xff]
  %v34 = vld [vmem:[%s1 + $0x48] sm:$0xff]
  %v35 = vld [vmem:[%s1 + $0x50] sm:$0xff]
  %v36 = vld [vmem:[%s1 + $0x58] sm:$0xff]
  %v37 = vld [vmem:[%s1 + $0x60] sm:$0xff]
  %v38 = vld [vmem:[%s1 + $0x68] sm:$0xff]
  %v39 = vld [vmem:[%s1 + $0x70] sm:$0xff]
  %v40 = vld [vmem:[%s1 + $0x78] sm:$0xff]
  %v41 = vld [vmem:[%s1 + $0x80] sm:$0xff]
  %v42 = vld [vmem:[%s1 + $0x88] sm:$0xff]
  %v43 = vld [vmem:[%s1 + $0x90] sm:$0xff]
  %v44 = vld [vmem:[%s1 + $0x98] sm:$0xff]
  %v45 = vld [vmem:[%s1 + $0xa0] sm:$0xff]
  %v46 = vld [vmem:[%s1 + $0xa8] sm:$0xff]
  %v47 = vld [vmem:[%s1 + $0xb0] sm:$0xff]
  %v48 = vld [vmem:[%s1 + $0xb8] sm:$0xff]
  %v49 = vld [vmem:[%s2] sm:$0x3]
  %v51 = vlaneseq
  %v52 = vshrl.u32 %v51, 7
  %v53 = vsub.s32 0, %v52
  %v54 = vrot.slane %v49, %v53
  %v55 = vlaneseq
  %v56 = vshrl.u32 %v55, 7
  %v57 = vsub.s32 1, %v56
  %v58 = vrot.slane %v49, %v57
  %v85 = vunpack.c.l.b16 %v25
  %v86 = vunpack.c.h.b16 %v25
  %v87 = vunpack.c.l.b16 %v26
  %v88 = vunpack.c.h.b16 %v26
  %v89 = vunpack.c.l.b16 %v27
  %v90 = vunpack.c.h.b16 %v27
  %v91 = vunpack.c.l.b16 %v28
  %v92 = vunpack.c.h.b16 %v28
  %v93 = vunpack.c.l.b16 %v29
  %v94 = vunpack.c.h.b16 %v29
  %v95 = vunpack.c.l.b16 %v30
  %v96 = vunpack.c.h.b16 %v30
  %v97 = vunpack.c.l.b16 %v31
  %v98 = vunpack.c.h.b16 %v31
  %v99 = vunpack.c.l.b16 %v32
  %v100 = vunpack.c.h.b16 %v32
  %v101 = vunpack.c.l.b16 %v33
  %v102 = vunpack.c.h.b16 %v33
  %v103 = vunpack.c.l.b16 %v34
  %v104 = vunpack.c.h.b16 %v34
  %v105 = vunpack.c.l.b16 %v35
  %v106 = vunpack.c.h.b16 %v35
  %v107 = vunpack.c.l.b16 %v36
  %v108 = vunpack.c.h.b16 %v36
  %v109 = vunpack.c.l.b16 %v37
  %v110 = vunpack.c.h.b16 %v37
  %v111 = vunpack.c.l.b16 %v38
  %v112 = vunpack.c.h.b16 %v38
  %v113 = vunpack.c.l.b16 %v39
  %v114 = vunpack.c.h.b16 %v39
  %v115 = vunpack.c.l.b16 %v40
  %v116 = vunpack.c.h.b16 %v40
  %v117 = vunpack.c.l.b16 %v41
  %v118 = vunpack.c.h.b16 %v41
  %v119 = vunpack.c.l.b16 %v42
  %v120 = vunpack.c.h.b16 %v42
  %v121 = vunpack.c.l.b16 %v43
  %v122 = vunpack.c.h.b16 %v43
  %v123 = vunpack.c.l.b16 %v44
  %v124 = vunpack.c.h.b16 %v44
  %v125 = vunpack.c.l.b16 %v45
  %v126 = vunpack.c.h.b16 %v45
  %v127 = vunpack.c.l.b16 %v46
  %v128 = vunpack.c.h.b16 %v46
  %v129 = vunpack.c.l.b16 %v47
  %v130 = vunpack.c.h.b16 %v47
  %v131 = vunpack.c.l.b16 %v48
  %v132 = vunpack.c.h.b16 %v48
  %v133 = vpack.c.b16 %v87, %v85
  %v134 = vpack.c.b16 %v88, %v86
  %v135 = vpack.c.b16 %v91, %v89
  %v136 = vpack.c.b16 %v92, %v90
  %v137 = vpack.c.b16 %v95, %v93
  %v138 = vpack.c.b16 %v96, %v94
  %v139 = vpack.c.b16 %v99, %v97
  %v140 = vpack.c.b16 %v100, %v98
  %v141 = vpack.c.b16 %v103, %v101
  %v142 = vpack.c.b16 %v104, %v102
  %v143 = vpack.c.b16 %v107, %v105
  %v144 = vpack.c.b16 %v108, %v106
  %v145 = vpack.c.b16 %v111, %v109
  %v146 = vpack.c.b16 %v112, %v110
  %v147 = vpack.c.b16 %v115, %v113
  %v148 = vpack.c.b16 %v116, %v114
  %v149 = vpack.c.b16 %v119, %v117
  %v150 = vpack.c.b16 %v120, %v118
  %v151 = vpack.c.b16 %v123, %v121
  %v152 = vpack.c.b16 %v124, %v122
  %v153 = vpack.c.b16 %v127, %v125
  %v154 = vpack.c.b16 %v128, %v126
  %v155 = vpack.c.b16 %v131, %v129
  %v156 = vpack.c.b16 %v132, %v130
  %vm181 = vcmask 523264
  %v183 = vsel %vm181, %v24, 0
  %185 = vmatprep.subr.bf16.mxu0 %v134
  %186 = vmatpush1.bf16.msra.mxu0 %v133
  %187 = vmatprep.subr.bf16.mxu0 %v136
  %188 = vmatpush1.bf16.msra.mxu0 %v135
  %189 = vmatprep.subr.bf16.mxu0 %v138
  %190 = vmatpush1.bf16.msra.mxu0 %v137
  %191 = vmatprep.subr.bf16.mxu0 %v140
  %192 = vmatpush1.bf16.msra.mxu0 %v139
  %193 = vmatprep.subr.bf16.mxu0 %v142
  %194 = vmatpush1.bf16.msra.mxu0 %v141
  %195 = vmatprep.subr.bf16.mxu0 %v144
  %196 = vmatpush1.bf16.msra.mxu0 %v143
  %197 = vmatprep.subr.bf16.mxu0 %v146
  %198 = vmatpush1.bf16.msra.mxu0 %v145
  %199 = vmatprep.subr.bf16.mxu0 %v148
  %200 = vmatpush1.bf16.msra.mxu0 %v147
  %201 = vmatprep.subr.bf16.mxu0 %v150
  %202 = vmatpush1.bf16.msra.mxu0 %v149
  %203 = vmatprep.subr.bf16.mxu0 %v152
  %204 = vmatpush1.bf16.msra.mxu0 %v151
  %205 = vmatprep.subr.bf16.mxu0 %v154
  %206 = vmatpush1.bf16.msra.mxu0 %v153
  %207 = vmatprep.subr.bf16.mxu0 %v156
  %208 = vmatpush1.bf16.msra.mxu0 %v155
  %209 = vmatprep.subr.bf16.mxu0 0
  %210 = vmatpush1.bf16.msra.mxu0 0
  %211 = vmatprep.subr.bf16.mxu0 0
  %212 = vmatpush1.bf16.msra.mxu0 0
  %213 = vmatprep.subr.bf16.mxu0 0
  %214 = vmatpush1.bf16.msra.mxu0 0
  %215 = vmatprep.subr.bf16.mxu0 0
  %216 = vmatpush1.bf16.msra.mxu0 0
  %217 = vmatprep.mubr.bf16.mxu0 %v183
  %218 = vmatmul.mubr.bf16.gmra.mrb[0].mxu0 %v23
  %v219 = vpop.f32.mrb[0].mxu0
  %v220 = vadd.f32 %v54, %v219
  %v221 = vpop.f32.mrb[0].mxu0
  %v222 = vadd.f32 %v58, %v221
  %v223 = vpop.f32.mrb[0].mxu0
  %v224 = vpop.f32.mrb[0].mxu0
  %225 = vdwg.mxu0
  %v226 = vxor.u32 %v220, 2147483648
  %v227 = vxor.u32 %v222, 2147483648
  %v228 = vmul.f32 %v226, 1.442695
  %v229 = vpow.pop %v228
  %v230 = vmul.f32 %v227, 1.442695
  %v231 = vpow.pop %v230
  %v232 = vadd.f32 %v229, 1.0
  %v233 = vadd.f32 %v231, 1.0
  %v234 = vrcp.pop %v232
  %v235 = vmul.f32 1.0, %v234
  %v236 = vrcp.pop %v233
  %v237 = vmul.f32 1.0, %v236
  %v238 = vmul.f32 %v220, %v235
  %v239 = vmul.f32 %v222, %v237
  %v240 = vpack.c.bf16 %v238, %v238
  %v241 = vpack.c.bf16 %v239, %v239
  %v242 = vld [vmem:[%s3] sm:$0xff]
  %v243 = vld [vmem:[%s3 + $0x8] sm:$0xff]
  %v244 = vld [vmem:[%s3 + $0x10] sm:$0xff]
  %v245 = vld [vmem:[%s3 + $0x18] sm:$0xff]
  %v246 = vld [vmem:[%s3 + $0x20] sm:$0xff]
  %v247 = vld [vmem:[%s3 + $0x28] sm:$0xff]
  %v248 = vld [vmem:[%s3 + $0x30] sm:$0xff]
  %v249 = vld [vmem:[%s3 + $0x38] sm:$0xff]
  %v250 = vld [vmem:[%s3 + $0x40] sm:$0xff]
  %v251 = vld [vmem:[%s3 + $0x48] sm:$0xff]
  %v252 = vld [vmem:[%s3 + $0x50] sm:$0xff]
  %v253 = vld [vmem:[%s3 + $0x58] sm:$0xff]
  %v254 = vld [vmem:[%s3 + $0x60] sm:$0xff]
  %v255 = vld [vmem:[%s3 + $0x68] sm:$0xff]
  %v256 = vld [vmem:[%s3 + $0x70] sm:$0xff]
  %v257 = vld [vmem:[%s3 + $0x78] sm:$0xff]
  %v258 = vld [vmem:[%s3 + $0x80] sm:$0xff]
  %v259 = vld [vmem:[%s3 + $0x88] sm:$0xff]
  %v260 = vld [vmem:[%s3 + $0x90] sm:$0xff]
  %v261 = vld [vmem:[%s3 + $0x98] sm:$0xff]
  %v262 = vld [vmem:[%s3 + $0xa0] sm:$0xff]
  %v263 = vld [vmem:[%s3 + $0xa8] sm:$0xff]
  %v264 = vld [vmem:[%s3 + $0xb0] sm:$0xff]
  %v265 = vld [vmem:[%s3 + $0xb8] sm:$0xff]
  %v266 = vld [vmem:[%s3 + $0xc0] sm:$0xff]
  %v267 = vld [vmem:[%s3 + $0xc8] sm:$0xff]
  %v268 = vld [vmem:[%s3 + $0xd0] sm:$0xff]
  %v269 = vld [vmem:[%s3 + $0xd8] sm:$0xff]
  %v270 = vld [vmem:[%s3 + $0xe0] sm:$0xff]
  %v271 = vld [vmem:[%s3 + $0xe8] sm:$0xff]
  %v272 = vld [vmem:[%s3 + $0xf0] sm:$0xff]
  %v273 = vld [vmem:[%s3 + $0xf8] sm:$0xff]
  %v274 = vld [vmem:[%s4] sm:$0x3]
  %v276 = vlaneseq
  %v277 = vshrl.u32 %v276, 7
  %v278 = vsub.s32 0, %v277
  %v279 = vrot.slane %v274, %v278
  %v280 = vlaneseq
  %v281 = vshrl.u32 %v280, 7
  %v282 = vsub.s32 1, %v281
  %v283 = vrot.slane %v274, %v282
  %v318 = vunpack.c.l.b16 %v242
  %v319 = vunpack.c.h.b16 %v242
  %v320 = vunpack.c.l.b16 %v243
  %v321 = vunpack.c.h.b16 %v243
  %v322 = vunpack.c.l.b16 %v244
  %v323 = vunpack.c.h.b16 %v244
  %v324 = vunpack.c.l.b16 %v245
  %v325 = vunpack.c.h.b16 %v245
  %v326 = vunpack.c.l.b16 %v246
  %v327 = vunpack.c.h.b16 %v246
  %v328 = vunpack.c.l.b16 %v247
  %v329 = vunpack.c.h.b16 %v247
  %v330 = vunpack.c.l.b16 %v248
  %v331 = vunpack.c.h.b16 %v248
  %v332 = vunpack.c.l.b16 %v249
  %v333 = vunpack.c.h.b16 %v249
  %v334 = vunpack.c.l.b16 %v250
  %v335 = vunpack.c.h.b16 %v250
  %v336 = vunpack.c.l.b16 %v251
  %v337 = vunpack.c.h.b16 %v251
  %v338 = vunpack.c.l.b16 %v252
  %v339 = vunpack.c.h.b16 %v252
  %v340 = vunpack.c.l.b16 %v253
  %v341 = vunpack.c.h.b16 %v253
  %v342 = vunpack.c.l.b16 %v254
  %v343 = vunpack.c.h.b16 %v254
  %v344 = vunpack.c.l.b16 %v255
  %v345 = vunpack.c.h.b16 %v255
  %v346 = vunpack.c.l.b16 %v256
  %v347 = vunpack.c.h.b16 %v256
  %v348 = vunpack.c.l.b16 %v257
  %v349 = vunpack.c.h.b16 %v257
  %v350 = vunpack.c.l.b16 %v258
  %v351 = vunpack.c.h.b16 %v258
  %v352 = vunpack.c.l.b16 %v259
  %v353 = vunpack.c.h.b16 %v259
  %v354 = vunpack.c.l.b16 %v260
  %v355 = vunpack.c.h.b16 %v260
  %v356 = vunpack.c.l.b16 %v261
  %v357 = vunpack.c.h.b16 %v261
  %v358 = vunpack.c.l.b16 %v262
  %v359 = vunpack.c.h.b16 %v262
  %v360 = vunpack.c.l.b16 %v263
  %v361 = vunpack.c.h.b16 %v263
  %v362 = vunpack.c.l.b16 %v264
  %v363 = vunpack.c.h.b16 %v264
  %v364 = vunpack.c.l.b16 %v265
  %v365 = vunpack.c.h.b16 %v265
  %v366 = vunpack.c.l.b16 %v266
  %v367 = vunpack.c.h.b16 %v266
  %v368 = vunpack.c.l.b16 %v267
  %v369 = vunpack.c.h.b16 %v267
  %v370 = vunpack.c.l.b16 %v268
  %v371 = vunpack.c.h.b16 %v268
  %v372 = vunpack.c.l.b16 %v269
  %v373 = vunpack.c.h.b16 %v269
  %v374 = vunpack.c.l.b16 %v270
  %v375 = vunpack.c.h.b16 %v270
  %v376 = vunpack.c.l.b16 %v271
  %v377 = vunpack.c.h.b16 %v271
  %v378 = vunpack.c.l.b16 %v272
  %v379 = vunpack.c.h.b16 %v272
  %v380 = vunpack.c.l.b16 %v273
  %v381 = vunpack.c.h.b16 %v273
  %v382 = vpack.c.b16 %v320, %v318
  %v383 = vpack.c.b16 %v321, %v319
  %v384 = vpack.c.b16 %v324, %v322
  %v385 = vpack.c.b16 %v325, %v323
  %v386 = vpack.c.b16 %v328, %v326
  %v387 = vpack.c.b16 %v329, %v327
  %v388 = vpack.c.b16 %v332, %v330
  %v389 = vpack.c.b16 %v333, %v331
  %v390 = vpack.c.b16 %v336, %v334
  %v391 = vpack.c.b16 %v337, %v335
  %v392 = vpack.c.b16 %v340, %v338
  %v393 = vpack.c.b16 %v341, %v339
  %v394 = vpack.c.b16 %v344, %v342
  %v395 = vpack.c.b16 %v345, %v343
  %v396 = vpack.c.b16 %v348, %v346
  %v397 = vpack.c.b16 %v349, %v347
  %v398 = vpack.c.b16 %v352, %v350
  %v399 = vpack.c.b16 %v353, %v351
  %v400 = vpack.c.b16 %v356, %v354
  %v401 = vpack.c.b16 %v357, %v355
  %v402 = vpack.c.b16 %v360, %v358
  %v403 = vpack.c.b16 %v361, %v359
  %v404 = vpack.c.b16 %v364, %v362
  %v405 = vpack.c.b16 %v365, %v363
  %v406 = vpack.c.b16 %v368, %v366
  %v407 = vpack.c.b16 %v369, %v367
  %v408 = vpack.c.b16 %v372, %v370
  %v409 = vpack.c.b16 %v373, %v371
  %v410 = vpack.c.b16 %v376, %v374
  %v411 = vpack.c.b16 %v377, %v375
  %v412 = vpack.c.b16 %v380, %v378
  %v413 = vpack.c.b16 %v381, %v379
  %446 = vmatprep.subr.bf16.mxu0 %v383
  %447 = vmatpush1.bf16.msra.mxu0 %v382
  %448 = vmatprep.subr.bf16.mxu0 %v385
  %449 = vmatpush1.bf16.msra.mxu0 %v384
  %450 = vmatprep.subr.bf16.mxu0 %v387
  %451 = vmatpush1.bf16.msra.mxu0 %v386
  %452 = vmatprep.subr.bf16.mxu0 %v389
  %453 = vmatpush1.bf16.msra.mxu0 %v388
  %454 = vmatprep.subr.bf16.mxu0 %v391
  %455 = vmatpush1.bf16.msra.mxu0 %v390
  %456 = vmatprep.subr.bf16.mxu0 %v393
  %457 = vmatpush1.bf16.msra.mxu0 %v392
  %458 = vmatprep.subr.bf16.mxu0 %v395
  %459 = vmatpush1.bf16.msra.mxu0 %v394
  %460 = vmatprep.subr.bf16.mxu0 %v397
  %461 = vmatpush1.bf16.msra.mxu0 %v396
  %462 = vmatprep.subr.bf16.mxu0 %v399
  %463 = vmatpush1.bf16.msra.mxu0 %v398
  %464 = vmatprep.subr.bf16.mxu0 %v401
  %465 = vmatpush1.bf16.msra.mxu0 %v400
  %466 = vmatprep.subr.bf16.mxu0 %v403
  %467 = vmatpush1.bf16.msra.mxu0 %v402
  %468 = vmatprep.subr.bf16.mxu0 %v405
  %469 = vmatpush1.bf16.msra.mxu0 %v404
  %470 = vmatprep.subr.bf16.mxu0 %v407
  %471 = vmatpush1.bf16.msra.mxu0 %v406
  %472 = vmatprep.subr.bf16.mxu0 %v409
  %473 = vmatpush1.bf16.msra.mxu0 %v408
  %474 = vmatprep.subr.bf16.mxu0 %v411
  %475 = vmatpush1.bf16.msra.mxu0 %v410
  %476 = vmatprep.subr.bf16.mxu0 %v413
  %477 = vmatpush1.bf16.msra.mxu0 %v412
  %478 = vmatprep.mubr.bf16.mxu0 %v241
  %479 = vmatmul.mubr.bf16.gmra.mrb[0].mxu0 %v240
  %v480 = vpop.f32.mrb[0].mxu0
  %v481 = vadd.f32 %v279, %v480
  %v482 = vpop.f32.mrb[0].mxu0
  %v483 = vadd.f32 %v283, %v482
  %v484 = vpop.f32.mrb[0].mxu0
  %v485 = vpop.f32.mrb[0].mxu0
  %486 = vdwg.mxu0
  %487 = vst [vmem:[%s5] sm:$0xff] %v481
  %488 = vst.msk [vmem:[%s5 + $0x8] sm:$0xff] %vm181, %v483
  // Predicated region
  $region22: #{cond_mlp_forward.1} parent=0 // pred_check
    _
  $region23: #{cond_mlp_forward.1} parent=0 // pred_check_branch
    %490 = sbr.rel (0) target = $region25
  $region24: #{cond_mlp_forward.1} parent=0 // pred_region
    _
  $region25: #{cond_mlp_forward.1} parent=0 // pred_fallthru
    _
  // Predicated region
  $region26: #{cond_mlp_forward.1} parent=0 // pred_check
    _
  $region27: #{cond_mlp_forward.1} parent=0 // pred_check_branch
    %492 = sbr.rel (0) target = $region29
  $region28: #{cond_mlp_forward.1} parent=0 // pred_region
    _
  $region29: #{cond_mlp_forward.1} parent=0 // pred_fallthru
    _

</llo_original>
